<compile_context>
chip_gen: v7x
topology: tpu7x:2x2x1
jax: 0.10.0
libtpu: 0.0.40
codegen_flags: <defaults>
</compile_context>

<pallas_src>
import math
import jax
import jax.numpy as jnp
from jax.experimental import pallas as pl
from jax.experimental.pallas import tpu as pltpu

_LANE = 128
_SUBLANE = 8
_TILE_BYTES = 4 << 20          # ~4 MiB per x tile (double-buffered x+out ~16 MiB)
_VMEM_LIMIT = 32 << 20         # fits v5e/v6e/v7x physical VMEM with headroom
_FAST_PATH_BYTES = 1 << 20     # below this, plain XLA elementwise is faster


def _modulate_kernel(x_ref, ss_ref, o_ref):
    # x_ref: (T_R, T_HW); ss_ref: (T_R, 2) with col 0 = scale, col 1 = shift.
    scale = ss_ref[:, 0:1]
    shift = ss_ref[:, 1:2]
    o_ref[...] = (x_ref[...] * scale + shift).astype(o_ref.dtype)


def _pick_tile(total, align, cap):
    """Largest multiple of `align` that divides `total` and is <= cap (0 if none)."""
    best = 0
    upper = min(total, cap)
    for cand in range(align, upper + 1, align):
        if total % cand == 0:
            best = cand
    return best


def affine_transform(x, latent, w, b, *, force_pallas=False):
    """AdaIN affine modulation.

    x:      (B, C, H, W) float32 (NCHW)
    latent: (B, L)
    w:      (L, 2C)  -- torch fc.weight (2C, L) transposed
    b:      (2C,)    -- torch fc.bias
    """
    B, C, H, W = x.shape
    HW = H * W
    R = B * C
    dtype_bytes = jnp.dtype(x.dtype).itemsize

    # --- FC hoisted out of the grid: one tiny GEMM, "+1" folded into bias. ---
    b_adj = b + jnp.concatenate([jnp.ones((C,), b.dtype), jnp.zeros((C,), b.dtype)])
    style = latent @ w + b_adj                              # (B, 2C)
    # Merged per-row side input: row (b,c) = [scale_bc, shift_bc].
    ss = jnp.stack([style[:, :C], style[:, C:]], axis=-1).reshape(R, 2)

    x2 = x.reshape(R, HW)

    # --- Tiny-tensor fast path: launch/pipeline overhead would dominate. ---
    if (R * HW * dtype_bytes <= _FAST_PATH_BYTES) and not force_pallas:
        out2 = x2 * ss[:, 0:1] + ss[:, 1:2]
        return out2.reshape(B, C, H, W)

    # --- Pad lane axis to a multiple of 128 so every store is unmasked. ---
    HW_p = ((HW + _LANE - 1) // _LANE) * _LANE
    if HW_p != HW:
        x2 = jnp.pad(x2, ((0, 0), (0, HW_p - HW)))

    # --- Lane/sublane-dense tiling with a ~4 MiB per-x-tile budget. ---
    t_hw = _pick_tile(HW_p, _LANE, min(HW_p, 16384))
    if t_hw == 0:                                           # cannot happen post-pad
        t_hw = HW_p

    max_rows = max(_SUBLANE,
                   (_TILE_BYTES // (t_hw * dtype_bytes)) // _SUBLANE * _SUBLANE)
    t_r = _pick_tile(R, _SUBLANE, max_rows)
    if t_r == 0:                                            # R < 8 or awkward R
        t_r = R                                             # full extent is legal

    # Megacore: ensure the leading (row) axis has >= 2 blocks when possible so
    # both v7x TensorCores are used; neutral at worst on single-TC chips.
    if R // t_r < 2 and R >= 2 * _SUBLANE and R % _SUBLANE == 0:
        t_half = _pick_tile(R, _SUBLANE, R // 2)
        if t_half > 0:
            t_r = t_half

    grid = (R // t_r, HW_p // t_hw)                         # rows outer, hw inner

    out = pl.pallas_call(
        _modulate_kernel,
        out_shape=jax.ShapeDtypeStruct((R, HW_p), x.dtype),
        grid=grid,
        in_specs=[
            pl.BlockSpec((t_r, t_hw), lambda r, c: (r, c)),  # x tile
            pl.BlockSpec((t_r, 2), lambda r, c: (r, 0)),     # scale/shift rows
        ],
        out_specs=pl.BlockSpec((t_r, t_hw), lambda r, c: (r, c)),
        compiler_params=pltpu.CompilerParams(
            dimension_semantics=("parallel", "parallel"),
            vmem_limit_bytes=_VMEM_LIMIT),
    )(x2, ss)

    if HW_p != HW:
        out = out[:, :HW]
    return out.reshape(B, C, H, W)


if __name__ == "__main__":
    B, C, H, W = 2, 4, 16, 16
    latent_dim = 32

    key = jax.random.PRNGKey(0)
    kx, kl, kw, kb = jax.random.split(key, 4)

    x = jax.random.normal(kx, (B, C, H, W), dtype=jnp.float32)
    latent = jax.random.normal(kl, (B, latent_dim), dtype=jnp.float32)

    # Deterministic fc params (torch.nn.Linear-style uniform init).
    limit = 1.0 / math.sqrt(latent_dim)
    # Stored as (latent_dim, 2C), i.e. torch weight (2C, latent_dim) transposed.
    w = jax.random.uniform(kw, (latent_dim, 2 * C), dtype=jnp.float32,
                           minval=-limit, maxval=limit)
    b = jax.random.uniform(kb, (2 * C,), dtype=jnp.float32,
                           minval=-limit, maxval=limit)

    # Force the Pallas path at this tiny demo size so the kernel is exercised.
    out = affine_transform(x, latent, w, b, force_pallas=True)
    out = jax.block_until_ready(out)

    # Pure-JAX reference (PyTorch semantics).
    style = latent @ w + b                               # (B, 2C)
    scale = (style[:, :C] + 1.0)[:, :, None, None]       # (B, C, 1, 1)
    shift = style[:, C:][:, :, None, None]
    ref = x * scale + shift
    assert jnp.allclose(out, ref, atol=1e-5, rtol=1e-5), "pallas path mismatch"

    # The auto-selected tiny-tensor XLA fast path must match as well.
    out_fast = jax.block_until_ready(affine_transform(x, latent, w, b))
    assert jnp.allclose(out_fast, ref, atol=1e-5, rtol=1e-5), "fast path mismatch"

    print("KERNEL_OK")
</pallas_src>

<mosaic_0001>
module attributes {stable_mosaic.version = 11 : i64} {
  func.func @_modulate_kernel(%arg0: i32, %arg1: i32, %arg2: memref<8x256xf32, #tpu.memory_space<vmem>>, %arg3: memref<8x2xf32, #tpu.memory_space<vmem>>, %arg4: memref<8x256xf32, #tpu.memory_space<vmem>>) attributes {dimension_semantics = [#tpu.dimension_semantics<parallel>, #tpu.dimension_semantics<parallel>], iteration_bounds = array<i64: 1, 1>, scalar_prefetch = 0 : i64, scratch_operands = 0 : i64, tpu.core_type = #tpu.core_type<tc>, window_params = [{transform_indices = @transform_0, window_bounds = array<i64: 8, 256>}, {transform_indices = @transform_1, window_bounds = array<i64: 8, 2>}, {transform_indices = @transform_2, window_bounds = array<i64: 8, 256>}]} {
    %c0 = arith.constant 0 : index
    %c0_0 = arith.constant 0 : index
    %0 = vector.load %arg3[%c0, %c0_0] : memref<8x2xf32, #tpu.memory_space<vmem>>, vector<8x1xf32>
    %c0_1 = arith.constant 0 : index
    %c1 = arith.constant 1 : index
    %1 = vector.load %arg3[%c0_1, %c1] : memref<8x2xf32, #tpu.memory_space<vmem>>, vector<8x1xf32>
    %c0_2 = arith.constant 0 : index
    %c0_3 = arith.constant 0 : index
    %2 = vector.load %arg2[%c0_2, %c0_3] : memref<8x256xf32, #tpu.memory_space<vmem>>, vector<8x256xf32>
    %3 = vector.broadcast %0 : vector<8x1xf32> to vector<8x256xf32>
    %4 = arith.mulf %2, %3 : vector<8x256xf32>
    %5 = vector.broadcast %1 : vector<8x1xf32> to vector<8x256xf32>
    %6 = arith.addf %4, %5 : vector<8x256xf32>
    %c0_4 = arith.constant 0 : index
    %c0_5 = arith.constant 0 : index
    %7 = vector.load %arg4[%c0_4, %c0_5] : memref<8x256xf32, #tpu.memory_space<vmem>>, vector<8x256xf32>
    tpu.vector_store %arg4[%c0_4, %c0_5], %6 {strides = array<i32>} : memref<8x256xf32, #tpu.memory_space<vmem>>, vector<8x256xf32>,
    return
  }
  func.func @transform_0(%arg0: i32, %arg1: i32) -> (i32, i32) {
    %c0_i32 = arith.constant 0 : i32
    return %arg0, %arg1 : i32, i32
  }
  func.func @transform_1(%arg0: i32, %arg1: i32) -> (i32, i32) {
    %c0_i32 = arith.constant 0 : i32
    %c0_i32_0 = arith.constant 0 : i32
    return %arg0, %c0_i32 : i32, i32
  }
  func.func @transform_2(%arg0: i32, %arg1: i32) -> (i32, i32) {
    %c0_i32 = arith.constant 0 : i32
    return %arg0, %arg1 : i32, i32
  }
}

</mosaic_0001>

<llo_original>
// kernel: tpu_custom_call.1
$region0: #{tpu_custom_call.1}
  #allocation0 [shape = 'u32[]', space=smem, size = 0x4, offset = 0x4, fixed_abs, tag = 'smem constant byte address 0x4 - core index']
  #allocation1 [shape = 'u32[144,128]{1,0:T(1,128)}', space=vmem, size = 0x12000, scoped, tag = 'internal scratch']
  %s0 = inlined_call_operand.hbm [shape: f32[8,256], index: 0, kind: input, shape index: {}]
  %s1 = inlined_call_operand.vmem [shape: f32[8,2], index: 1, kind: input, shape index: {}]
  %s2 = inlined_call_operand.hbm [shape: f32[8,256], index: 2, kind: output, shape index: {}]
  %s3 = sld [smem:[#allocation0]]
  $region22: #{tpu_custom_call.1} parent=0
    _
  %s5 = ssub.s32 1, %s3
  %s6 = scalar_select 0, %s5, %s3
  $region1: #{tpu_custom_call.1} parent=0
    #allocation2 [shape = 'u8[8192]{0}', space=vmem, size = 0x2000, scoped, tag = 'input window, operand 0, single buffered']
    #allocation3 [shape = 's32[1]{0}', space=sflag, size = 0x4, scoped, tag = 'scoped memory for tpu_custom_call.1']
    #allocation4 [shape = 's32[1]{0}', space=sflag, size = 0x4, scoped, tag = 'scoped memory for tpu_custom_call.1']
    #allocation5 [shape = 'u8[8192]{0}', space=vmem, size = 0x2000, scoped, tag = 'output window, operand 0, single buffered']
    %7 = vsyncpa [#allocation3], 0
    %8 = vsyncpa [#allocation4], 0
    // Predicated region
    $region2: #{tpu_custom_call.1} parent=1 // pred_check
      _
    $region3: #{tpu_custom_call.1} parent=1 // pred_check_branch
      %10 = sbr.rel (0) target = $region5
    $region4: #{tpu_custom_call.1} parent=1 // pred_region
      %s12 = ssub.s32 256, 256
      %13 = vsyncadd [#allocation3], %s12
      %s15 = sshll.u32 [#allocation2], 4
      %s16 = int_to_ptr.vmem [resolvable:$true] %s15
      %18 = dma.hbm_to_vmem [thread:$0]  %s0, 256, %s16, [#allocation3]
    $region5: #{tpu_custom_call.1} parent=1 // pred_fallthru
      _
    // Predicated region
    $region6: #{tpu_custom_call.1} parent=1 // pred_check
      _
    $region7: #{tpu_custom_call.1} parent=1 // pred_check_branch
      %20 = sbr.rel (0) target = $region9
    $region8: #{tpu_custom_call.1} parent=1 // pred_region
      _
    $region9: #{tpu_custom_call.1} parent=1 // pred_fallthru
      _
    // Predicated region
    $region10: #{tpu_custom_call.1} parent=1 // pred_check
      _
    $region11: #{tpu_custom_call.1} parent=1 // pred_check_branch
      %22 = sbr.rel (0) target = $region13
    $region12: #{tpu_custom_call.1} parent=1 // pred_region
      %23 = dma.done [#allocation3], 256
    $region13: #{tpu_custom_call.1} parent=1 // pred_fallthru
      _
    %v24 = vld [vmem:[%s1] sm:$0xff]
    %v25 = vld [vmem:[#allocation2] sm:$0xff]
    %v26 = vld [vmem:[#allocation2 + $0x8] sm:$0xff]
    %28 = vset.pattern.permute.xlu0 0
    %29 = vperm.xlu0 %28, %v24
    %v30 = vpop.permute.xlu0 %29
    %v32 = vmul.f32 %v25, %v30
    %v33 = vmul.f32 %v26, %v30
    %34 = vset.pattern.permute.xlu0 1
    %35 = vperm.xlu0 %34, %v24
    %v36 = vpop.permute.xlu0 %35
    %v38 = vadd.f32 %v32, %v36
    %v39 = vadd.f32 %v33, %v36
    %40 = vst [vmem:[#allocation5] sm:$0xff] %v38
    %41 = vst [vmem:[#allocation5 + $0x8] sm:$0xff] %v39
    // Predicated region
    $region14: #{tpu_custom_call.1} parent=1 // pred_check
      _
    $region15: #{tpu_custom_call.1} parent=1 // pred_check_branch
      %43 = sbr.rel (0) target = $region17
    $region16: #{tpu_custom_call.1} parent=1 // pred_region
      %s45 = ssub.s32 256, 256
      %46 = vsyncadd [#allocation4], %s45
      %s48 = sshll.u32 [#allocation5], 4
      %s49 = int_to_ptr.vmem [resolvable:$true] %s48
      %51 = dma.vmem_to_hbm [thread:$0]  %s49, 256, %s2, [#allocation4]
    $region17: #{tpu_custom_call.1} parent=1 // pred_fallthru
      _
    // Predicated region
    $region18: #{tpu_custom_call.1} parent=1 // pred_check
      _
    $region19: #{tpu_custom_call.1} parent=1 // pred_check_branch
      %53 = sbr.rel (0) target = $region21
    $region20: #{tpu_custom_call.1} parent=1 // pred_region
      %54 = dma.done [#allocation4], 256
    $region21: #{tpu_custom_call.1} parent=1 // pred_fallthru
      _
    %55 = vsyncpa [#allocation3], 1
    %56 = vsyncpa [#allocation4], 1

</llo_original>
